<compile_context>
chip_gen: v5e
topology: v5e:2x2
jax: 0.10.0
libtpu: 0.0.40
codegen_flags: <defaults>
</compile_context>

<pallas_src>
import functools

import jax
import jax.numpy as jnp
from jax import lax
from jax.experimental import pallas as pl
from jax.experimental.pallas import tpu as pltpu


def _lstm_kernel(x_ref, wih_ref, whh_ref, bias_ref, out_ref, *, T, B):
    """Fused input projection + LSTM recurrence, single invocation.

    x_ref   : (T*B, E)   time-major input, rows [t*B:(t+1)*B] are step t
    wih_ref : (E, 4H)    W_ih^T, gate columns ordered (i, f, g, o)
    whh_ref : (H, 4H)    W_hh^T, gate columns ordered (i, f, g, o)
    bias_ref: (1, 4H)    b_ih + b_hh
    out_ref : (B, H)     last hidden state (written once)
    """
    H = whh_ref.shape[0]

    wih = wih_ref[...]          # (E, 4H) lane-dense
    whh = whh_ref[...]          # (H, 4H) lane-dense, loop-invariant
    bias = bias_ref[...]        # (1, 4H)

    # Fused input projection for all T*B rows: one lane-dense MXU matmul + bias add.
    xp = jnp.dot(x_ref[...], wih, preferred_element_type=jnp.float32) + bias  # (T*B, 4H)

    h = jnp.zeros((B, H), jnp.float32)
    c = jnp.zeros((B, H), jnp.float32)

    # T is small and static -> fully unrolled straight-line recurrence, static slices.
    for t in range(T):
        # Single fused gate matmul on the serial critical path: (B, H) @ (H, 4H).
        gates = xp[t * B:(t + 1) * B, :] + jnp.dot(
            h, whh, preferred_element_type=jnp.float32)          # (B, 4H)

        # Two dense transcendentals over the full pre-activation, then lane slices.
        sg = jax.nn.sigmoid(gates)                                # i, f, o live here
        tg = jnp.tanh(gates)                                      # g lives here
        i_gate = sg[:, 0 * H:1 * H]
        f_gate = sg[:, 1 * H:2 * H]
        g_gate = tg[:, 2 * H:3 * H]
        o_gate = sg[:, 3 * H:4 * H]

        c = f_gate * c + i_gate * g_gate
        h = o_gate * jnp.tanh(c)

    out_ref[...] = h.astype(out_ref.dtype)


def hierarchical_lstm_forward(x, w_ih, w_hh, b_ih, b_hh):
    """
    x:     (T, B, E)  float32  -- encoded_past_utterances, time-major (PyTorch default)
    w_ih:  (4H, E), w_hh: (4H, H), b_ih/b_hh: (4H,)   (PyTorch nn.LSTM layout, gates i,f,g,o)
    returns last_hidden: (1, B, H)
    """
    T, B, E = x.shape
    H4 = w_ih.shape[0]
    H = H4 // 4

    x_flat = jnp.asarray(x, jnp.float32).reshape(T * B, E)                 # (T*B, E)
    wih_t = jnp.transpose(jnp.asarray(w_ih, jnp.float32))                  # (E, 4H)
    whh_t = jnp.transpose(jnp.asarray(w_hh, jnp.float32))                  # (H, 4H)
    bias = (jnp.asarray(b_ih, jnp.float32)
            + jnp.asarray(b_hh, jnp.float32)).reshape(1, H4)               # (1, 4H)

    kernel = functools.partial(_lstm_kernel, T=T, B=B)

    last_h = pl.pallas_call(
        kernel,
        out_shape=jax.ShapeDtypeStruct((B, H), jnp.float32),
        # No grid: single invocation, all (tiny) operands resident in VMEM.
        in_specs=[
            pl.BlockSpec(memory_space=pltpu.MemorySpace.VMEM),  # x_flat
            pl.BlockSpec(memory_space=pltpu.MemorySpace.VMEM),  # wih_t
            pl.BlockSpec(memory_space=pltpu.MemorySpace.VMEM),  # whh_t
            pl.BlockSpec(memory_space=pltpu.MemorySpace.VMEM),  # bias
        ],
        out_specs=pl.BlockSpec(memory_space=pltpu.MemorySpace.VMEM),
    )(x_flat, wih_t, whh_t, bias)

    return last_h.reshape(1, B, H)


def _lstm_reference(x, w_ih, w_hh, b_ih, b_hh):
    """Pure-JAX reference matching PyTorch nn.LSTM forward (single layer, zero init state)."""
    T, B, E = x.shape
    H = w_hh.shape[1]
    b = b_ih + b_hh

    def step(carry, x_t):
        h, c = carry
        gates = x_t @ w_ih.T + h @ w_hh.T + b
        i = jax.nn.sigmoid(gates[:, 0 * H:1 * H])
        f = jax.nn.sigmoid(gates[:, 1 * H:2 * H])
        g = jnp.tanh(gates[:, 2 * H:3 * H])
        o = jax.nn.sigmoid(gates[:, 3 * H:4 * H])
        c = f * c + i * g
        h = o * jnp.tanh(c)
        return (h, c), None

    (h, _), _ = lax.scan(step, (jnp.zeros((B, H)), jnp.zeros((B, H))), x)
    return h.reshape(1, B, H)


if __name__ == "__main__":
    # Small shapes consistent with the module: seq_len=8 past utterances,
    # batch=2, embedding_dim=32 (utterance_emb_dim*2), hidden_dim=32.
    T, B, E, H = 8, 2, 32, 32

    key = jax.random.PRNGKey(0)
    kx, k1, k2, k3, k4 = jax.random.split(key, 5)

    # Deterministic param init, PyTorch-style U(-1/sqrt(H), 1/sqrt(H)).
    bound = 1.0 / (H ** 0.5)
    w_ih = jax.random.uniform(k1, (4 * H, E), jnp.float32, -bound, bound)
    w_hh = jax.random.uniform(k2, (4 * H, H), jnp.float32, -bound, bound)
    b_ih = jax.random.uniform(k3, (4 * H,), jnp.float32, -bound, bound)
    b_hh = jax.random.uniform(k4, (4 * H,), jnp.float32, -bound, bound)

    # encoded_past_utterances: (T, B, E)
    x = jax.random.normal(kx, (T, B, E), jnp.float32)

    last_hidden = hierarchical_lstm_forward(x, w_ih, w_hh, b_ih, b_hh)
    last_hidden = jax.block_until_ready(last_hidden)

    ref = _lstm_reference(x, w_ih, w_hh, b_ih, b_hh)
    assert last_hidden.shape == (1, B, H)
    assert jnp.allclose(last_hidden, ref, atol=1e-5, rtol=1e-5)

    print("KERNEL_OK")
</pallas_src>

<mosaic_0001>
module attributes {stable_mosaic.version = 11 : i64} {
  func.func @_lstm_kernel(%arg0: memref<16x32xf32, #tpu.memory_space<vmem>>, %arg1: memref<32x128xf32, #tpu.memory_space<vmem>>, %arg2: memref<32x128xf32, #tpu.memory_space<vmem>>, %arg3: memref<1x128xf32, #tpu.memory_space<vmem>>, %arg4: memref<2x32xf32, #tpu.memory_space<vmem>>) attributes {dimension_semantics = [], scalar_prefetch = 0 : i64, scratch_operands = 0 : i64, tpu.core_type = #tpu.core_type<tc>} {
    %c0 = arith.constant 0 : index
    %c0_0 = arith.constant 0 : index
    %0 = vector.load %arg1[%c0, %c0_0] : memref<32x128xf32, #tpu.memory_space<vmem>>, vector<32x128xf32>
    %c0_1 = arith.constant 0 : index
    %c0_2 = arith.constant 0 : index
    %1 = vector.load %arg2[%c0_1, %c0_2] : memref<32x128xf32, #tpu.memory_space<vmem>>, vector<32x128xf32>
    %c0_3 = arith.constant 0 : index
    %c0_4 = arith.constant 0 : index
    %2 = vector.load %arg3[%c0_3, %c0_4] : memref<1x128xf32, #tpu.memory_space<vmem>>, vector<1x128xf32>
    %c0_5 = arith.constant 0 : index
    %c0_6 = arith.constant 0 : index
    %3 = vector.load %arg0[%c0_5, %c0_6] : memref<16x32xf32, #tpu.memory_space<vmem>>, vector<16x32xf32>
    %cst = arith.constant dense<0.000000e+00> : vector<16x128xf32>
    %4 = tpu.matmul %3, %0, %cst {dimension_numbers = #tpu.dot_dimension_numbers<[1], [0], [0], [1], [0, 0, 1, 1], [], []>} : vector<16x32xf32>, vector<32x128xf32>, vector<16x128xf32> -> vector<16x128xf32>
    %5 = vector.broadcast %2 : vector<1x128xf32> to vector<16x128xf32>
    %6 = arith.addf %4, %5 : vector<16x128xf32>
    %cst_7 = arith.constant 0.000000e+00 : f32
    %7 = vector.broadcast %cst_7 : f32 to vector<2x32xf32>
    %cst_8 = arith.constant 0.000000e+00 : f32
    %8 = vector.broadcast %cst_8 : f32 to vector<2x32xf32>
    %9 = vector.extract_strided_slice %6 {offsets = [0, 0], sizes = [2, 128], strides = [1, 1]} : vector<16x128xf32> to vector<2x128xf32>
    %cst_9 = arith.constant dense<0.000000e+00> : vector<2x128xf32>
    %10 = tpu.matmul %7, %1, %cst_9 {dimension_numbers = #tpu.dot_dimension_numbers<[1], [0], [0], [1], [0, 0, 1, 1], [], []>} : vector<2x32xf32>, vector<32x128xf32>, vector<2x128xf32> -> vector<2x128xf32>
    %11 = arith.addf %9, %10 : vector<2x128xf32>
    %12 = arith.negf %11 : vector<2x128xf32>
    %13 = math.exp %12 : vector<2x128xf32>
    %cst_10 = arith.constant 1.000000e+00 : f32
    %14 = vector.broadcast %cst_10 : f32 to vector<2x128xf32>
    %15 = arith.addf %14, %13 : vector<2x128xf32>
    %16 = arith.divf %14, %15 : vector<2x128xf32>
    %17 = math.tanh %11 : vector<2x128xf32>
    %18 = vector.extract_strided_slice %16 {offsets = [0, 0], sizes = [2, 32], strides = [1, 1]} : vector<2x128xf32> to vector<2x32xf32>
    %19 = vector.extract_strided_slice %16 {offsets = [0, 32], sizes = [2, 32], strides = [1, 1]} : vector<2x128xf32> to vector<2x32xf32>
    %20 = vector.extract_strided_slice %17 {offsets = [0, 64], sizes = [2, 32], strides = [1, 1]} : vector<2x128xf32> to vector<2x32xf32>
    %21 = vector.extract_strided_slice %16 {offsets = [0, 96], sizes = [2, 32], strides = [1, 1]} : vector<2x128xf32> to vector<2x32xf32>
    %22 = arith.mulf %19, %8 : vector<2x32xf32>
    %23 = arith.mulf %18, %20 : vector<2x32xf32>
    %24 = arith.addf %22, %23 : vector<2x32xf32>
    %25 = math.tanh %24 : vector<2x32xf32>
    %26 = arith.mulf %21, %25 : vector<2x32xf32>
    %27 = vector.extract_strided_slice %6 {offsets = [2, 0], sizes = [2, 128], strides = [1, 1]} : vector<16x128xf32> to vector<2x128xf32>
    %cst_11 = arith.constant dense<0.000000e+00> : vector<2x128xf32>
    %28 = tpu.matmul %26, %1, %cst_11 {dimension_numbers = #tpu.dot_dimension_numbers<[1], [0], [0], [1], [0, 0, 1, 1], [], []>} : vector<2x32xf32>, vector<32x128xf32>, vector<2x128xf32> -> vector<2x128xf32>
    %29 = arith.addf %27, %28 : vector<2x128xf32>
    %30 = arith.negf %29 : vector<2x128xf32>
    %31 = math.exp %30 : vector<2x128xf32>
    %cst_12 = arith.constant 1.000000e+00 : f32
    %32 = vector.broadcast %cst_12 : f32 to vector<2x128xf32>
    %33 = arith.addf %32, %31 : vector<2x128xf32>
    %34 = arith.divf %32, %33 : vector<2x128xf32>
    %35 = math.tanh %29 : vector<2x128xf32>
    %36 = vector.extract_strided_slice %34 {offsets = [0, 0], sizes = [2, 32], strides = [1, 1]} : vector<2x128xf32> to vector<2x32xf32>
    %37 = vector.extract_strided_slice %34 {offsets = [0, 32], sizes = [2, 32], strides = [1, 1]} : vector<2x128xf32> to vector<2x32xf32>
    %38 = vector.extract_strided_slice %35 {offsets = [0, 64], sizes = [2, 32], strides = [1, 1]} : vector<2x128xf32> to vector<2x32xf32>
    %39 = vector.extract_strided_slice %34 {offsets = [0, 96], sizes = [2, 32], strides = [1, 1]} : vector<2x128xf32> to vector<2x32xf32>
    %40 = arith.mulf %37, %24 : vector<2x32xf32>
    %41 = arith.mulf %36, %38 : vector<2x32xf32>
    %42 = arith.addf %40, %41 : vector<2x32xf32>
    %43 = math.tanh %42 : vector<2x32xf32>
    %44 = arith.mulf %39, %43 : vector<2x32xf32>
    %45 = vector.extract_strided_slice %6 {offsets = [4, 0], sizes = [2, 128], strides = [1, 1]} : vector<16x128xf32> to vector<2x128xf32>
    %cst_13 = arith.constant dense<0.000000e+00> : vector<2x128xf32>
    %46 = tpu.matmul %44, %1, %cst_13 {dimension_numbers = #tpu.dot_dimension_numbers<[1], [0], [0], [1], [0, 0, 1, 1], [], []>} : vector<2x32xf32>, vector<32x128xf32>, vector<2x128xf32> -> vector<2x128xf32>
    %47 = arith.addf %45, %46 : vector<2x128xf32>
    %48 = arith.negf %47 : vector<2x128xf32>
    %49 = math.exp %48 : vector<2x128xf32>
    %cst_14 = arith.constant 1.000000e+00 : f32
    %50 = vector.broadcast %cst_14 : f32 to vector<2x128xf32>
    %51 = arith.addf %50, %49 : vector<2x128xf32>
    %52 = arith.divf %50, %51 : vector<2x128xf32>
    %53 = math.tanh %47 : vector<2x128xf32>
    %54 = vector.extract_strided_slice %52 {offsets = [0, 0], sizes = [2, 32], strides = [1, 1]} : vector<2x128xf32> to vector<2x32xf32>
    %55 = vector.extract_strided_slice %52 {offsets = [0, 32], sizes = [2, 32], strides = [1, 1]} : vector<2x128xf32> to vector<2x32xf32>
    %56 = vector.extract_strided_slice %53 {offsets = [0, 64], sizes = [2, 32], strides = [1, 1]} : vector<2x128xf32> to vector<2x32xf32>
    %57 = vector.extract_strided_slice %52 {offsets = [0, 96], sizes = [2, 32], strides = [1, 1]} : vector<2x128xf32> to vector<2x32xf32>
    %58 = arith.mulf %55, %42 : vector<2x32xf32>
    %59 = arith.mulf %54, %56 : vector<2x32xf32>
    %60 = arith.addf %58, %59 : vector<2x32xf32>
    %61 = math.tanh %60 : vector<2x32xf32>
    %62 = arith.mulf %57, %61 : vector<2x32xf32>
    %63 = vector.extract_strided_slice %6 {offsets = [6, 0], sizes = [2, 128], strides = [1, 1]} : vector<16x128xf32> to vector<2x128xf32>
    %cst_15 = arith.constant dense<0.000000e+00> : vector<2x128xf32>
    %64 = tpu.matmul %62, %1, %cst_15 {dimension_numbers = #tpu.dot_dimension_numbers<[1], [0], [0], [1], [0, 0, 1, 1], [], []>} : vector<2x32xf32>, vector<32x128xf32>, vector<2x128xf32> -> vector<2x128xf32>
    %65 = arith.addf %63, %64 : vector<2x128xf32>
    %66 = arith.negf %65 : vector<2x128xf32>
    %67 = math.exp %66 : vector<2x128xf32>
    %cst_16 = arith.constant 1.000000e+00 : f32
    %68 = vector.broadcast %cst_16 : f32 to vector<2x128xf32>
    %69 = arith.addf %68, %67 : vector<2x128xf32>
    %70 = arith.divf %68, %69 : vector<2x128xf32>
    %71 = math.tanh %65 : vector<2x128xf32>
    %72 = vector.extract_strided_slice %70 {offsets = [0, 0], sizes = [2, 32], strides = [1, 1]} : vector<2x128xf32> to vector<2x32xf32>
    %73 = vector.extract_strided_slice %70 {offsets = [0, 32], sizes = [2, 32], strides = [1, 1]} : vector<2x128xf32> to vector<2x32xf32>
    %74 = vector.extract_strided_slice %71 {offsets = [0, 64], sizes = [2, 32], strides = [1, 1]} : vector<2x128xf32> to vector<2x32xf32>
    %75 = vector.extract_strided_slice %70 {offsets = [0, 96], sizes = [2, 32], strides = [1, 1]} : vector<2x128xf32> to vector<2x32xf32>
    %76 = arith.mulf %73, %60 : vector<2x32xf32>
    %77 = arith.mulf %72, %74 : vector<2x32xf32>
    %78 = arith.addf %76, %77 : vector<2x32xf32>
    %79 = math.tanh %78 : vector<2x32xf32>
    %80 = arith.mulf %75, %79 : vector<2x32xf32>
    %81 = vector.extract_strided_slice %6 {offsets = [8, 0], sizes = [2, 128], strides = [1, 1]} : vector<16x128xf32> to vector<2x128xf32>
    %cst_17 = arith.constant dense<0.000000e+00> : vector<2x128xf32>
    %82 = tpu.matmul %80, %1, %cst_17 {dimension_numbers = #tpu.dot_dimension_numbers<[1], [0], [0], [1], [0, 0, 1, 1], [], []>} : vector<2x32xf32>, vector<32x128xf32>, vector<2x128xf32> -> vector<2x128xf32>
    %83 = arith.addf %81, %82 : vector<2x128xf32>
    %84 = arith.negf %83 : vector<2x128xf32>
    %85 = math.exp %84 : vector<2x128xf32>
    %cst_18 = arith.constant 1.000000e+00 : f32
    %86 = vector.broadcast %cst_18 : f32 to vector<2x128xf32>
    %87 = arith.addf %86, %85 : vector<2x128xf32>
    %88 = arith.divf %86, %87 : vector<2x128xf32>
    %89 = math.tanh %83 : vector<2x128xf32>
    %90 = vector.extract_strided_slice %88 {offsets = [0, 0], sizes = [2, 32], strides = [1, 1]} : vector<2x128xf32> to vector<2x32xf32>
    %91 = vector.extract_strided_slice %88 {offsets = [0, 32], sizes = [2, 32], strides = [1, 1]} : vector<2x128xf32> to vector<2x32xf32>
    %92 = vector.extract_strided_slice %89 {offsets = [0, 64], sizes = [2, 32], strides = [1, 1]} : vector<2x128xf32> to vector<2x32xf32>
    %93 = vector.extract_strided_slice %88 {offsets = [0, 96], sizes = [2, 32], strides = [1, 1]} : vector<2x128xf32> to vector<2x32xf32>
    %94 = arith.mulf %91, %78 : vector<2x32xf32>
    %95 = arith.mulf %90, %92 : vector<2x32xf32>
    %96 = arith.addf %94, %95 : vector<2x32xf32>
    %97 = math.tanh %96 : vector<2x32xf32>
    %98 = arith.mulf %93, %97 : vector<2x32xf32>
    %99 = vector.extract_strided_slice %6 {offsets = [10, 0], sizes = [2, 128], strides = [1, 1]} : vector<16x128xf32> to vector<2x128xf32>
    %cst_19 = arith.constant dense<0.000000e+00> : vector<2x128xf32>
    %100 = tpu.matmul %98, %1, %cst_19 {dimension_numbers = #tpu.dot_dimension_numbers<[1], [0], [0], [1], [0, 0, 1, 1], [], []>} : vector<2x32xf32>, vector<32x128xf32>, vector<2x128xf32> -> vector<2x128xf32>
    %101 = arith.addf %99, %100 : vector<2x128xf32>
    %102 = arith.negf %101 : vector<2x128xf32>
    %103 = math.exp %102 : vector<2x128xf32>
    %cst_20 = arith.constant 1.000000e+00 : f32
    %104 = vector.broadcast %cst_20 : f32 to vector<2x128xf32>
    %105 = arith.addf %104, %103 : vector<2x128xf32>
    %106 = arith.divf %104, %105 : vector<2x128xf32>
    %107 = math.tanh %101 : vector<2x128xf32>
    %108 = vector.extract_strided_slice %106 {offsets = [0, 0], sizes = [2, 32], strides = [1, 1]} : vector<2x128xf32> to vector<2x32xf32>
    %109 = vector.extract_strided_slice %106 {offsets = [0, 32], sizes = [2, 32], strides = [1, 1]} : vector<2x128xf32> to vector<2x32xf32>
    %110 = vector.extract_strided_slice %107 {offsets = [0, 64], sizes = [2, 32], strides = [1, 1]} : vector<2x128xf32> to vector<2x32xf32>
    %111 = vector.extract_strided_slice %106 {offsets = [0, 96], sizes = [2, 32], strides = [1, 1]} : vector<2x128xf32> to vector<2x32xf32>
    %112 = arith.mulf %109, %96 : vector<2x32xf32>
    %113 = arith.mulf %108, %110 : vector<2x32xf32>
    %114 = arith.addf %112, %113 : vector<2x32xf32>
    %115 = math.tanh %114 : vector<2x32xf32>
    %116 = arith.mulf %111, %115 : vector<2x32xf32>
    %117 = vector.extract_strided_slice %6 {offsets = [12, 0], sizes = [2, 128], strides = [1, 1]} : vector<16x128xf32> to vector<2x128xf32>
    %cst_21 = arith.constant dense<0.000000e+00> : vector<2x128xf32>
    %118 = tpu.matmul %116, %1, %cst_21 {dimension_numbers = #tpu.dot_dimension_numbers<[1], [0], [0], [1], [0, 0, 1, 1], [], []>} : vector<2x32xf32>, vector<32x128xf32>, vector<2x128xf32> -> vector<2x128xf32>
    %119 = arith.addf %117, %118 : vector<2x128xf32>
    %120 = arith.negf %119 : vector<2x128xf32>
    %121 = math.exp %120 : vector<2x128xf32>
    %cst_22 = arith.constant 1.000000e+00 : f32
    %122 = vector.broadcast %cst_22 : f32 to vector<2x128xf32>
    %123 = arith.addf %122, %121 : vector<2x128xf32>
    %124 = arith.divf %122, %123 : vector<2x128xf32>
    %125 = math.tanh %119 : vector<2x128xf32>
    %126 = vector.extract_strided_slice %124 {offsets = [0, 0], sizes = [2, 32], strides = [1, 1]} : vector<2x128xf32> to vector<2x32xf32>
    %127 = vector.extract_strided_slice %124 {offsets = [0, 32], sizes = [2, 32], strides = [1, 1]} : vector<2x128xf32> to vector<2x32xf32>
    %128 = vector.extract_strided_slice %125 {offsets = [0, 64], sizes = [2, 32], strides = [1, 1]} : vector<2x128xf32> to vector<2x32xf32>
    %129 = vector.extract_strided_slice %124 {offsets = [0, 96], sizes = [2, 32], strides = [1, 1]} : vector<2x128xf32> to vector<2x32xf32>
    %130 = arith.mulf %127, %114 : vector<2x32xf32>
    %131 = arith.mulf %126, %128 : vector<2x32xf32>
    %132 = arith.addf %130, %131 : vector<2x32xf32>
    %133 = math.tanh %132 : vector<2x32xf32>
    %134 = arith.mulf %129, %133 : vector<2x32xf32>
    %135 = vector.extract_strided_slice %6 {offsets = [14, 0], sizes = [2, 128], strides = [1, 1]} : vector<16x128xf32> to vector<2x128xf32>
    %cst_23 = arith.constant dense<0.000000e+00> : vector<2x128xf32>
    %136 = tpu.matmul %134, %1, %cst_23 {dimension_numbers = #tpu.dot_dimension_numbers<[1], [0], [0], [1], [0, 0, 1, 1], [], []>} : vector<2x32xf32>, vector<32x128xf32>, vector<2x128xf32> -> vector<2x128xf32>
    %137 = arith.addf %135, %136 : vector<2x128xf32>
    %138 = arith.negf %137 : vector<2x128xf32>
    %139 = math.exp %138 : vector<2x128xf32>
    %cst_24 = arith.constant 1.000000e+00 : f32
    %140 = vector.broadcast %cst_24 : f32 to vector<2x128xf32>
    %141 = arith.addf %140, %139 : vector<2x128xf32>
    %142 = arith.divf %140, %141 : vector<2x128xf32>
    %143 = math.tanh %137 : vector<2x128xf32>
    %144 = vector.extract_strided_slice %142 {offsets = [0, 0], sizes = [2, 32], strides = [1, 1]} : vector<2x128xf32> to vector<2x32xf32>
    %145 = vector.extract_strided_slice %142 {offsets = [0, 32], sizes = [2, 32], strides = [1, 1]} : vector<2x128xf32> to vector<2x32xf32>
    %146 = vector.extract_strided_slice %143 {offsets = [0, 64], sizes = [2, 32], strides = [1, 1]} : vector<2x128xf32> to vector<2x32xf32>
    %147 = vector.extract_strided_slice %142 {offsets = [0, 96], sizes = [2, 32], strides = [1, 1]} : vector<2x128xf32> to vector<2x32xf32>
    %148 = arith.mulf %145, %132 : vector<2x32xf32>
    %149 = arith.mulf %144, %146 : vector<2x32xf32>
    %150 = arith.addf %148, %149 : vector<2x32xf32>
    %151 = math.tanh %150 : vector<2x32xf32>
    %152 = arith.mulf %147, %151 : vector<2x32xf32>
    %c0_25 = arith.constant 0 : index
    %c0_26 = arith.constant 0 : index
    %153 = vector.load %arg4[%c0_25, %c0_26] : memref<2x32xf32, #tpu.memory_space<vmem>>, vector<2x32xf32>
    tpu.vector_store %arg4[%c0_25, %c0_26], %152 {strides = array<i32>} : memref<2x32xf32, #tpu.memory_space<vmem>>, vector<2x32xf32>,
    return
  }
}

</mosaic_0001>

<llo_original>
// kernel: tpu_custom_call.1
$region0: #{tpu_custom_call.1}
  #allocation0 [shape = 'u32[]', space=smem, size = 0x4, offset = 0x4, fixed_abs, tag = 'smem constant byte address 0x4 - core index']
  #allocation1 [shape = 'u32[72,128]{1,0:T(1,128)}', space=vmem, size = 0x9000, scoped, tag = 'internal scratch']
  %s0 = inlined_call_operand.hbm [shape: f32[16,32], index: 0, kind: input, shape index: {}]
  %s1 = inlined_call_operand.hbm [shape: f32[32,128], index: 1, kind: input, shape index: {}]
  %s2 = inlined_call_operand.hbm [shape: f32[32,128], index: 2, kind: input, shape index: {}]
  %s3 = inlined_call_operand.vmem [shape: f32[1,128], index: 3, kind: input, shape index: {}]
  %s4 = inlined_call_operand.hbm [shape: f32[2,32], index: 4, kind: output, shape index: {}]
  %s5 = sld [smem:[#allocation0]]
  $region38: #{tpu_custom_call.1} parent=0
    _
  %s7 = ssub.s32 1, %s5
  %s8 = scalar_select 0, %s7, %s5
  $region1: #{tpu_custom_call.1} parent=0
    #allocation2 [shape = 'u8[8192]{0}', space=vmem, size = 0x2000, scoped, tag = 'input window, operand 0, single buffered']
    #allocation3 [shape = 's32[1]{0}', space=sflag, size = 0x4, scoped, tag = 'scoped memory for tpu_custom_call.1']
    #allocation4 [shape = 's32[1]{0}', space=sflag, size = 0x4, scoped, tag = 'scoped memory for tpu_custom_call.1']
    #allocation5 [shape = 'u8[16384]{0}', space=vmem, size = 0x4000, scoped, tag = 'input window, operand 1, single buffered']
    #allocation6 [shape = 's32[1]{0}', space=sflag, size = 0x4, scoped, tag = 'scoped memory for tpu_custom_call.1']
    #allocation7 [shape = 'u8[16384]{0}', space=vmem, size = 0x4000, scoped, tag = 'input window, operand 2, single buffered']
    #allocation8 [shape = 'u8[1024]{0}', space=vmem, size = 0x400, scoped, tag = 'output window, operand 0, single buffered']
    %9 = vsyncpa [#allocation3], 0
    %10 = vsyncpa [#allocation6], 0
    %11 = vsyncpa [#allocation4], 0
    // Predicated region
    $region2: #{tpu_custom_call.1} parent=1 // pred_check
      _
    $region3: #{tpu_custom_call.1} parent=1 // pred_check_branch
      %13 = sbr.rel (0) target = $region5
    $region4: #{tpu_custom_call.1} parent=1 // pred_region
      %15 = vsyncadd [#allocation3], 0
      %s16 = sshll.u32 %s0, 4
      %s17 = int_to_ptr.hbm [resolvable:$true] %s16
      %s18 = sshll.u32 [#allocation2], 4
      %s19 = int_to_ptr.vmem [resolvable:$true] %s18
      %24 = dma.hbm_to_vmem [thread:$0]  %s17, 256, %s19, [#allocation3], 128, 128, 8
    $region5: #{tpu_custom_call.1} parent=1 // pred_fallthru
      _
    // Predicated region
    $region6: #{tpu_custom_call.1} parent=1 // pred_check
      _
    $region7: #{tpu_custom_call.1} parent=1 // pred_check_branch
      %26 = sbr.rel (0) target = $region9
    $region8: #{tpu_custom_call.1} parent=1 // pred_region
      %28 = vsyncadd [#allocation6], 0
      %s29 = sshll.u32 %s1, 4
      %s30 = int_to_ptr.hbm [resolvable:$true] %s29
      %s31 = sshll.u32 [#allocation5], 4
      %s32 = int_to_ptr.vmem [resolvable:$true] %s31
      %37 = dma.hbm_to_vmem [thread:$0]  %s30, 512, %s32, [#allocation6], 128, 128, 8
    $region9: #{tpu_custom_call.1} parent=1 // pred_fallthru
      _
    // Predicated region
    $region10: #{tpu_custom_call.1} parent=1 // pred_check
      _
    $region11: #{tpu_custom_call.1} parent=1 // pred_check_branch
      %39 = sbr.rel (0) target = $region13
    $region12: #{tpu_custom_call.1} parent=1 // pred_region
      %41 = vsyncadd [#allocation6], 0
      %s42 = sshll.u32 %s2, 4
      %s43 = int_to_ptr.hbm [resolvable:$true] %s42
      %s44 = sshll.u32 [#allocation7], 4
      %s45 = int_to_ptr.vmem [resolvable:$true] %s44
      %50 = dma.hbm_to_vmem [thread:$0]  %s43, 512, %s45, [#allocation6], 128, 128, 8
    $region13: #{tpu_custom_call.1} parent=1 // pred_fallthru
      _
    // Predicated region
    $region14: #{tpu_custom_call.1} parent=1 // pred_check
      _
    $region15: #{tpu_custom_call.1} parent=1 // pred_check_branch
      %52 = sbr.rel (0) target = $region17
    $region16: #{tpu_custom_call.1} parent=1 // pred_region
      _
    $region17: #{tpu_custom_call.1} parent=1 // pred_fallthru
      _
    // Predicated region
    $region18: #{tpu_custom_call.1} parent=1 // pred_check
      _
    $region19: #{tpu_custom_call.1} parent=1 // pred_check_branch
      %54 = sbr.rel (0) target = $region21
    $region20: #{tpu_custom_call.1} parent=1 // pred_region
      %56 = dma.done [#allocation3], 256
    $region21: #{tpu_custom_call.1} parent=1 // pred_fallthru
      _
    // Predicated region
    $region22: #{tpu_custom_call.1} parent=1 // pred_check
      _
    $region23: #{tpu_custom_call.1} parent=1 // pred_check_branch
      %58 = sbr.rel (0) target = $region25
    $region24: #{tpu_custom_call.1} parent=1 // pred_region
      %60 = dma.done [#allocation6], 512
    $region25: #{tpu_custom_call.1} parent=1 // pred_fallthru
      _
    // Predicated region
    $region26: #{tpu_custom_call.1} parent=1 // pred_check
      _
    $region27: #{tpu_custom_call.1} parent=1 // pred_check_branch
      %62 = sbr.rel (0) target = $region29
    $region28: #{tpu_custom_call.1} parent=1 // pred_region
      %64 = dma.done [#allocation6], 512
    $region29: #{tpu_custom_call.1} parent=1 // pred_fallthru
      _
    %v65 = vld [vmem:[#allocation5] sm:$0xff]
    %v66 = vld [vmem:[#allocation5 + $0x8] sm:$0xff]
    %v67 = vld [vmem:[#allocation5 + $0x10] sm:$0xff]
    %v68 = vld [vmem:[#allocation5 + $0x18] sm:$0xff]
    %v69 = vld [vmem:[#allocation7] sm:$0xff]
    %v70 = vld [vmem:[#allocation7 + $0x8] sm:$0xff]
    %v71 = vld [vmem:[#allocation7 + $0x10] sm:$0xff]
    %v72 = vld [vmem:[#allocation7 + $0x18] sm:$0xff]
    %v73 = vld [vmem:[%s3] sm:$0x1]
    %v74 = vld [vmem:[#allocation2] sm:$0xff]
    %v75 = vld [vmem:[#allocation2 + $0x8] sm:$0xff]
    %v77 = vperm.slane %v73, 0
    %vm79 = vcmask 261120
    %v81 = vsel %vm79, %v74, 0
    %v84 = vsel %vm79, %v75, 0
    %86 = vmatpush.msra.mxu0 0.0
    %87 = vmatpush.msra.mxu0 0.0
    %88 = vmatpush.msra.mxu0 0.0
    %89 = vmatpush.msra.mxu0 0.0
    %90 = vmatpush.msra.mxu0 0.0
    %91 = vmatpush.msra.mxu0 0.0
    %92 = vmatpush.msra.mxu0 0.0
    %93 = vmatpush.msra.mxu0 0.0
    %94 = vmatpush.msra.mxu0 0.0
    %95 = vmatpush.msra.mxu0 0.0
    %96 = vmatpush.msra.mxu0 0.0
    %97 = vmatpush.msra.mxu0 0.0
    %98 = vmatpush.msra.mxu0 %v68
    %99 = vmatpush.msra.mxu0 %v67
    %100 = vmatpush.msra.mxu0 %v66
    %101 = vmatpush.msra.mxu0 %v65
    %102 = vmatmul.f32.gmra.mxu0 %v81
    %v103 = vpop.f32.mrf.mxu0
    %v104 = vadd.f32 %v77, %v103
    %105 = vmatmul.f32.gmra.mxu0 %v84
    %v106 = vpop.f32.mrf.mxu0
    %v107 = vadd.f32 %v77, %v106
    %108 = vdwg.mxu0
    %v110 = vsel %vm79, 0.0, 0
    %112 = vmatpush.msra.mxu0 0.0
    %113 = vmatpush.msra.mxu0 0.0
    %114 = vmatpush.msra.mxu0 0.0
    %115 = vmatpush.msra.mxu0 0.0
    %116 = vmatpush.msra.mxu0 0.0
    %117 = vmatpush.msra.mxu0 0.0
    %118 = vmatpush.msra.mxu0 0.0
    %119 = vmatpush.msra.mxu0 0.0
    %120 = vmatpush.msra.mxu0 0.0
    %121 = vmatpush.msra.mxu0 0.0
    %122 = vmatpush.msra.mxu0 0.0
    %123 = vmatpush.msra.mxu0 0.0
    %124 = vmatpush.msra.mxu0 %v72
    %125 = vmatpush.msra.mxu0 %v71
    %126 = vmatpush.msra.mxu0 %v70
    %127 = vmatpush.msra.mxu0 %v69
    %128 = vmatmul.f32.gmra.mxu0 %v110
    %v129 = vpop.f32.mrf.mxu0
    %v130 = vadd.f32 0.0, %v129
    %131 = vdwg.mxu0
    %v132 = vadd.f32 %v104, %v130
    %v133 = vxor.u32 %v132, 2147483648
    %v134 = vmul.f32 %v133, 1.442695
    %v135 = vpow.pop %v134
    %v136 = vadd.f32 %v135, 1.0
    %v137 = vrcp.pop %v136
    %v138 = vmul.f32 %v136, %v137
    %v139 = vsub.f32 1.0, %v138
    %v140 = vmul.f32 %v137, %v139
    %v141 = vadd.f32 %v137, %v140
    %vm142 = vweird.f32 %v136
    %vm143 = vweird.f32 %v137
    %vm144 = vmor %vm142, %vm143
    %v145 = vsel %vm144, %v137, %v141
    %v146 = vand.u32 2147483647, %v136
    %vm147 = vcmp.eq.f32.partialorder %v146, 8.507059e+37
    %v148 = vand.u32 %v136, 2147483648
    %v149 = vor.u32 1.1754944e-38, %v148
    %v150 = vsel %vm147, %v149, %v145
    %v151 = vmul.f32 1.0, %v150
    %v152 = vtanh.pop %v132
    %v153 = vmul.f32 %v151, 0.0
    %155 = vrot.lane.b32.xlu0 %v152, 64
    %v156 = vpop.permute.xlu0 %155
    %v158 = vmul.f32 %v151, %v156
    %160 = vrot.lane.b32.xlu0 %v158, 32
    %v161 = vpop.permute.xlu0 %160
    %v163 = vadd.f32 %v153, %v161
    %v164 = vtanh.pop %v163
    %166 = vrot.lane.b32.xlu0 %v164, 64
    %v167 = vpop.permute.xlu0 %166
    %v169 = vmul.f32 %v151, %v167
    %171 = vrot.lane.b32.xlu0 %v169, 32
    %v172 = vpop.permute.xlu0 %171
    %v173 = vsel %vm79, %v172, 0
    %175 = vmatpush.msra.mxu0 0.0
    %176 = vmatpush.msra.mxu0 0.0
    %177 = vmatpush.msra.mxu0 0.0
    %178 = vmatpush.msra.mxu0 0.0
    %179 = vmatpush.msra.mxu0 0.0
    %180 = vmatpush.msra.mxu0 0.0
    %181 = vmatpush.msra.mxu0 0.0
    %182 = vmatpush.msra.mxu0 0.0
    %183 = vmatpush.msra.mxu0 0.0
    %184 = vmatpush.msra.mxu0 0.0
    %185 = vmatpush.msra.mxu0 0.0
    %186 = vmatpush.msra.mxu0 0.0
    %187 = vmatpush.msra.mxu0 %v72
    %188 = vmatpush.msra.mxu0 %v71
    %189 = vmatpush.msra.mxu0 %v70
    %190 = vmatpush.msra.mxu0 %v69
    %191 = vmatmul.f32.gmra.mxu0 %v173
    %v192 = vpop.f32.mrf.mxu0
    %v193 = vadd.f32 0.0, %v192
    %194 = vdwg.mxu0
    %v196 = vrot.slane %v193, 6
    %v198 = vadd.f32 %v104, %v196
    %v199 = vxor.u32 %v198, 2147483648
    %v200 = vmul.f32 %v199, 1.442695
    %v201 = vpow.pop %v200
    %v202 = vadd.f32 %v201, 1.0
    %v203 = vrcp.pop %v202
    %v204 = vmul.f32 %v202, %v203
    %v205 = vsub.f32 1.0, %v204
    %v206 = vmul.f32 %v203, %v205
    %v207 = vadd.f32 %v203, %v206
    %vm208 = vweird.f32 %v202
    %vm209 = vweird.f32 %v203
    %vm210 = vmor %vm208, %vm209
    %v211 = vsel %vm210, %v203, %v207
    %v212 = vand.u32 2147483647, %v202
    %vm213 = vcmp.eq.f32.partialorder %v212, 8.507059e+37
    %v214 = vand.u32 %v202, 2147483648
    %v215 = vor.u32 1.1754944e-38, %v214
    %v216 = vsel %vm213, %v215, %v211
    %v217 = vmul.f32 1.0, %v216
    %v218 = vtanh.pop %v198
    %v220 = vrot.slane %v163, 6
    %v222 = vmul.f32 %v217, %v220
    %224 = vrot.lane.b32.xlu0 %v218, 64
    %v225 = vpop.permute.xlu0 %224
    %v227 = vmul.f32 %v217, %v225
    %229 = vrot.lane.b32.xlu0 %v227, 32
    %v230 = vpop.permute.xlu0 %229
    %v232 = vadd.f32 %v222, %v230
    %v233 = vtanh.pop %v232
    %235 = vrot.lane.b32.xlu0 %v233, 64
    %v236 = vpop.permute.xlu0 %235
    %v238 = vmul.f32 %v217, %v236
    %v240 = vrot.slane %v238, 2
    %241 = vrot.lane.b32.xlu0 %v240, 32
    %v242 = vpop.permute.xlu0 %241
    %v243 = vsel %vm79, %v242, 0
    %245 = vmatpush.msra.mxu0 0.0
    %246 = vmatpush.msra.mxu0 0.0
    %247 = vmatpush.msra.mxu0 0.0
    %248 = vmatpush.msra.mxu0 0.0
    %249 = vmatpush.msra.mxu0 0.0
    %250 = vmatpush.msra.mxu0 0.0
    %251 = vmatpush.msra.mxu0 0.0
    %252 = vmatpush.msra.mxu0 0.0
    %253 = vmatpush.msra.mxu0 0.0
    %254 = vmatpush.msra.mxu0 0.0
    %255 = vmatpush.msra.mxu0 0.0
    %256 = vmatpush.msra.mxu0 0.0
    %257 = vmatpush.msra.mxu0 %v72
    %258 = vmatpush.msra.mxu0 %v71
    %259 = vmatpush.msra.mxu0 %v70
    %260 = vmatpush.msra.mxu0 %v69
    %261 = vmatmul.f32.gmra.mxu0 %v243
    %v262 = vpop.f32.mrf.mxu0
    %v263 = vadd.f32 0.0, %v262
    %264 = vdwg.mxu0
    %v266 = vrot.slane %v263, 4
    %v268 = vadd.f32 %v104, %v266
    %v269 = vxor.u32 %v268, 2147483648
    %v270 = vmul.f32 %v269, 1.442695
    %v271 = vpow.pop %v270
    %v272 = vadd.f32 %v271, 1.0
    %v273 = vrcp.pop %v272
    %v274 = vmul.f32 %v272, %v273
    %v275 = vsub.f32 1.0, %v274
    %v276 = vmul.f32 %v273, %v275
    %v277 = vadd.f32 %v273, %v276
    %vm278 = vweird.f32 %v272
    %vm279 = vweird.f32 %v273
    %vm280 = vmor %vm278, %vm279
    %v281 = vsel %vm280, %v273, %v277
    %v282 = vand.u32 2147483647, %v272
    %vm283 = vcmp.eq.f32.partialorder %v282, 8.507059e+37
    %v284 = vand.u32 %v272, 2147483648
    %v285 = vor.u32 1.1754944e-38, %v284
    %v286 = vsel %vm283, %v285, %v281
    %v287 = vmul.f32 1.0, %v286
    %v288 = vtanh.pop %v268
    %v290 = vrot.slane %v232, 6
    %v292 = vmul.f32 %v287, %v290
    %294 = vrot.lane.b32.xlu0 %v288, 64
    %v295 = vpop.permute.xlu0 %294
    %v297 = vmul.f32 %v287, %v295
    %299 = vrot.lane.b32.xlu0 %v297, 32
    %v300 = vpop.permute.xlu0 %299
    %v302 = vadd.f32 %v292, %v300
    %v303 = vtanh.pop %v302
    %305 = vrot.lane.b32.xlu0 %v303, 64
    %v306 = vpop.permute.xlu0 %305
    %v308 = vmul.f32 %v287, %v306
    %v310 = vrot.slane %v308, 4
    %311 = vrot.lane.b32.xlu0 %v310, 32
    %v312 = vpop.permute.xlu0 %311
    %v313 = vsel %vm79, %v312, 0
    %315 = vmatpush.msra.mxu0 0.0
    %316 = vmatpush.msra.mxu0 0.0
    %317 = vmatpush.msra.mxu0 0.0
    %318 = vmatpush.msra.mxu0 0.0
    %319 = vmatpush.msra.mxu0 0.0
    %320 = vmatpush.msra.mxu0 0.0
    %321 = vmatpush.msra.mxu0 0.0
    %322 = vmatpush.msra.mxu0 0.0
    %323 = vmatpush.msra.mxu0 0.0
    %324 = vmatpush.msra.mxu0 0.0
    %325 = vmatpush.msra.mxu0 0.0
    %326 = vmatpush.msra.mxu0 0.0
    %327 = vmatpush.msra.mxu0 %v72
    %328 = vmatpush.msra.mxu0 %v71
    %329 = vmatpush.msra.mxu0 %v70
    %330 = vmatpush.msra.mxu0 %v69
    %331 = vmatmul.f32.gmra.mxu0 %v313
    %v332 = vpop.f32.mrf.mxu0
    %v333 = vadd.f32 0.0, %v332
    %334 = vdwg.mxu0
    %v336 = vrot.slane %v333, 2
    %v338 = vadd.f32 %v104, %v336
    %v339 = vxor.u32 %v338, 2147483648
    %v340 = vmul.f32 %v339, 1.442695
    %v341 = vpow.pop %v340
    %v342 = vadd.f32 %v341, 1.0
    %v343 = vrcp.pop %v342
    %v344 = vmul.f32 %v342, %v343
    %v345 = vsub.f32 1.0, %v344
    %v346 = vmul.f32 %v343, %v345
    %v347 = vadd.f32 %v343, %v346
    %vm348 = vweird.f32 %v342
    %vm349 = vweird.f32 %v343
    %vm350 = vmor %vm348, %vm349
    %v351 = vsel %vm350, %v343, %v347
    %v352 = vand.u32 2147483647, %v342
    %vm353 = vcmp.eq.f32.partialorder %v352, 8.507059e+37
    %v354 = vand.u32 %v342, 2147483648
    %v355 = vor.u32 1.1754944e-38, %v354
    %v356 = vsel %vm353, %v355, %v351
    %v357 = vmul.f32 1.0, %v356
    %v358 = vtanh.pop %v338
    %v360 = vrot.slane %v302, 6
    %v362 = vmul.f32 %v357, %v360
    %364 = vrot.lane.b32.xlu0 %v358, 64
    %v365 = vpop.permute.xlu0 %364
    %v367 = vmul.f32 %v357, %v365
    %369 = vrot.lane.b32.xlu0 %v367, 32
    %v370 = vpop.permute.xlu0 %369
    %v372 = vadd.f32 %v362, %v370
    %v373 = vtanh.pop %v372
    %375 = vrot.lane.b32.xlu0 %v373, 64
    %v376 = vpop.permute.xlu0 %375
    %v378 = vmul.f32 %v357, %v376
    %v380 = vrot.slane %v378, 6
    %381 = vrot.lane.b32.xlu0 %v380, 32
    %v382 = vpop.permute.xlu0 %381
    %v383 = vsel %vm79, %v382, 0
    %385 = vmatpush.msra.mxu0 0.0
    %386 = vmatpush.msra.mxu0 0.0
    %387 = vmatpush.msra.mxu0 0.0
    %388 = vmatpush.msra.mxu0 0.0
    %389 = vmatpush.msra.mxu0 0.0
    %390 = vmatpush.msra.mxu0 0.0
    %391 = vmatpush.msra.mxu0 0.0
    %392 = vmatpush.msra.mxu0 0.0
    %393 = vmatpush.msra.mxu0 0.0
    %394 = vmatpush.msra.mxu0 0.0
    %395 = vmatpush.msra.mxu0 0.0
    %396 = vmatpush.msra.mxu0 0.0
    %397 = vmatpush.msra.mxu0 %v72
    %398 = vmatpush.msra.mxu0 %v71
    %399 = vmatpush.msra.mxu0 %v70
    %400 = vmatpush.msra.mxu0 %v69
    %401 = vmatmul.f32.gmra.mxu0 %v383
    %v402 = vpop.f32.mrf.mxu0
    %v403 = vadd.f32 0.0, %v402
    %404 = vdwg.mxu0
    %v405 = vadd.f32 %v107, %v403
    %v406 = vxor.u32 %v405, 2147483648
    %v407 = vmul.f32 %v406, 1.442695
    %v408 = vpow.pop %v407
    %v409 = vadd.f32 %v408, 1.0
    %v410 = vrcp.pop %v409
    %v411 = vmul.f32 %v409, %v410
    %v412 = vsub.f32 1.0, %v411
    %v413 = vmul.f32 %v410, %v412
    %v414 = vadd.f32 %v410, %v413
    %vm415 = vweird.f32 %v409
    %vm416 = vweird.f32 %v410
    %vm417 = vmor %vm415, %vm416
    %v418 = vsel %vm417, %v410, %v414
    %v419 = vand.u32 2147483647, %v409
    %vm420 = vcmp.eq.f32.partialorder %v419, 8.507059e+37
    %v421 = vand.u32 %v409, 2147483648
    %v422 = vor.u32 1.1754944e-38, %v421
    %v423 = vsel %vm420, %v422, %v418
    %v424 = vmul.f32 1.0, %v423
    %v425 = vtanh.pop %v405
    %v427 = vrot.slane %v372, 6
    %v429 = vmul.f32 %v424, %v427
    %431 = vrot.lane.b32.xlu0 %v425, 64
    %v432 = vpop.permute.xlu0 %431
    %v434 = vmul.f32 %v424, %v432
    %436 = vrot.lane.b32.xlu0 %v434, 32
    %v437 = vpop.permute.xlu0 %436
    %v439 = vadd.f32 %v429, %v437
    %v440 = vtanh.pop %v439
    %442 = vrot.lane.b32.xlu0 %v440, 64
    %v443 = vpop.permute.xlu0 %442
    %v445 = vmul.f32 %v424, %v443
    %447 = vrot.lane.b32.xlu0 %v445, 32
    %v448 = vpop.permute.xlu0 %447
    %v449 = vsel %vm79, %v448, 0
    %451 = vmatpush.msra.mxu0 0.0
    %452 = vmatpush.msra.mxu0 0.0
    %453 = vmatpush.msra.mxu0 0.0
    %454 = vmatpush.msra.mxu0 0.0
    %455 = vmatpush.msra.mxu0 0.0
    %456 = vmatpush.msra.mxu0 0.0
    %457 = vmatpush.msra.mxu0 0.0
    %458 = vmatpush.msra.mxu0 0.0
    %459 = vmatpush.msra.mxu0 0.0
    %460 = vmatpush.msra.mxu0 0.0
    %461 = vmatpush.msra.mxu0 0.0
    %462 = vmatpush.msra.mxu0 0.0
    %463 = vmatpush.msra.mxu0 %v72
    %464 = vmatpush.msra.mxu0 %v71
    %465 = vmatpush.msra.mxu0 %v70
    %466 = vmatpush.msra.mxu0 %v69
    %467 = vmatmul.f32.gmra.mxu0 %v449
    %v468 = vpop.f32.mrf.mxu0
    %v469 = vadd.f32 0.0, %v468
    %470 = vdwg.mxu0
    %v472 = vrot.slane %v469, 6
    %v474 = vadd.f32 %v107, %v472
    %v475 = vxor.u32 %v474, 2147483648
    %v476 = vmul.f32 %v475, 1.442695
    %v477 = vpow.pop %v476
    %v478 = vadd.f32 %v477, 1.0
    %v479 = vrcp.pop %v478
    %v480 = vmul.f32 %v478, %v479
    %v481 = vsub.f32 1.0, %v480
    %v482 = vmul.f32 %v479, %v481
    %v483 = vadd.f32 %v479, %v482
    %vm484 = vweird.f32 %v478
    %vm485 = vweird.f32 %v479
    %vm486 = vmor %vm484, %vm485
    %v487 = vsel %vm486, %v479, %v483
    %v488 = vand.u32 2147483647, %v478
    %vm489 = vcmp.eq.f32.partialorder %v488, 8.507059e+37
    %v490 = vand.u32 %v478, 2147483648
    %v491 = vor.u32 1.1754944e-38, %v490
    %v492 = vsel %vm489, %v491, %v487
    %v493 = vmul.f32 1.0, %v492
    %v494 = vtanh.pop %v474
    %v496 = vrot.slane %v439, 6
    %v498 = vmul.f32 %v493, %v496
    %500 = vrot.lane.b32.xlu0 %v494, 64
    %v501 = vpop.permute.xlu0 %500
    %v503 = vmul.f32 %v493, %v501
    %505 = vrot.lane.b32.xlu0 %v503, 32
    %v506 = vpop.permute.xlu0 %505
    %v508 = vadd.f32 %v498, %v506
    %v509 = vtanh.pop %v508
    %511 = vrot.lane.b32.xlu0 %v509, 64
    %v512 = vpop.permute.xlu0 %511
    %v514 = vmul.f32 %v493, %v512
    %v516 = vrot.slane %v514, 2
    %517 = vrot.lane.b32.xlu0 %v516, 32
    %v518 = vpop.permute.xlu0 %517
    %v519 = vsel %vm79, %v518, 0
    %521 = vmatpush.msra.mxu0 0.0
    %522 = vmatpush.msra.mxu0 0.0
    %523 = vmatpush.msra.mxu0 0.0
    %524 = vmatpush.msra.mxu0 0.0
    %525 = vmatpush.msra.mxu0 0.0
    %526 = vmatpush.msra.mxu0 0.0
    %527 = vmatpush.msra.mxu0 0.0
    %528 = vmatpush.msra.mxu0 0.0
    %529 = vmatpush.msra.mxu0 0.0
    %530 = vmatpush.msra.mxu0 0.0
    %531 = vmatpush.msra.mxu0 0.0
    %532 = vmatpush.msra.mxu0 0.0
    %533 = vmatpush.msra.mxu0 %v72
    %534 = vmatpush.msra.mxu0 %v71
    %535 = vmatpush.msra.mxu0 %v70
    %536 = vmatpush.msra.mxu0 %v69
    %537 = vmatmul.f32.gmra.mxu0 %v519
    %v538 = vpop.f32.mrf.mxu0
    %v539 = vadd.f32 0.0, %v538
    %540 = vdwg.mxu0
    %v542 = vrot.slane %v539, 4
    %v544 = vadd.f32 %v107, %v542
    %v545 = vxor.u32 %v544, 2147483648
    %v546 = vmul.f32 %v545, 1.442695
    %v547 = vpow.pop %v546
    %v548 = vadd.f32 %v547, 1.0
    %v549 = vrcp.pop %v548
    %v550 = vmul.f32 %v548, %v549
    %v551 = vsub.f32 1.0, %v550
    %v552 = vmul.f32 %v549, %v551
    %v553 = vadd.f32 %v549, %v552
    %vm554 = vweird.f32 %v548
    %vm555 = vweird.f32 %v549
    %vm556 = vmor %vm554, %vm555
    %v557 = vsel %vm556, %v549, %v553
    %v558 = vand.u32 2147483647, %v548
    %vm559 = vcmp.eq.f32.partialorder %v558, 8.507059e+37
    %v560 = vand.u32 %v548, 2147483648
    %v561 = vor.u32 1.1754944e-38, %v560
    %v562 = vsel %vm559, %v561, %v557
    %v563 = vmul.f32 1.0, %v562
    %v564 = vtanh.pop %v544
    %v566 = vrot.slane %v508, 6
    %v568 = vmul.f32 %v563, %v566
    %570 = vrot.lane.b32.xlu0 %v564, 64
    %v571 = vpop.permute.xlu0 %570
    %v573 = vmul.f32 %v563, %v571
    %575 = vrot.lane.b32.xlu0 %v573, 32
    %v576 = vpop.permute.xlu0 %575
    %v578 = vadd.f32 %v568, %v576
    %v579 = vtanh.pop %v578
    %581 = vrot.lane.b32.xlu0 %v579, 64
    %v582 = vpop.permute.xlu0 %581
    %v584 = vmul.f32 %v563, %v582
    %v586 = vrot.slane %v584, 4
    %587 = vrot.lane.b32.xlu0 %v586, 32
    %v588 = vpop.permute.xlu0 %587
    %v589 = vsel %vm79, %v588, 0
    %591 = vmatpush.msra.mxu0 0.0
    %592 = vmatpush.msra.mxu0 0.0
    %593 = vmatpush.msra.mxu0 0.0
    %594 = vmatpush.msra.mxu0 0.0
    %595 = vmatpush.msra.mxu0 0.0
    %596 = vmatpush.msra.mxu0 0.0
    %597 = vmatpush.msra.mxu0 0.0
    %598 = vmatpush.msra.mxu0 0.0
    %599 = vmatpush.msra.mxu0 0.0
    %600 = vmatpush.msra.mxu0 0.0
    %601 = vmatpush.msra.mxu0 0.0
    %602 = vmatpush.msra.mxu0 0.0
    %603 = vmatpush.msra.mxu0 %v72
    %604 = vmatpush.msra.mxu0 %v71
    %605 = vmatpush.msra.mxu0 %v70
    %606 = vmatpush.msra.mxu0 %v69
    %607 = vmatmul.f32.gmra.mxu0 %v589
    %v608 = vpop.f32.mrf.mxu0
    %v609 = vadd.f32 0.0, %v608
    %610 = vdwg.mxu0
    %v612 = vrot.slane %v609, 2
    %v614 = vadd.f32 %v107, %v612
    %v615 = vxor.u32 %v614, 2147483648
    %v616 = vmul.f32 %v615, 1.442695
    %v617 = vpow.pop %v616
    %v618 = vadd.f32 %v617, 1.0
    %v619 = vrcp.pop %v618
    %v620 = vmul.f32 %v618, %v619
    %v621 = vsub.f32 1.0, %v620
    %v622 = vmul.f32 %v619, %v621
    %v623 = vadd.f32 %v619, %v622
    %vm624 = vweird.f32 %v618
    %vm625 = vweird.f32 %v619
    %vm626 = vmor %vm624, %vm625
    %v627 = vsel %vm626, %v619, %v623
    %v628 = vand.u32 2147483647, %v618
    %vm629 = vcmp.eq.f32.partialorder %v628, 8.507059e+37
    %v630 = vand.u32 %v618, 2147483648
    %v631 = vor.u32 1.1754944e-38, %v630
    %v632 = vsel %vm629, %v631, %v627
    %v633 = vmul.f32 1.0, %v632
    %v634 = vtanh.pop %v614
    %v636 = vrot.slane %v578, 6
    %v638 = vmul.f32 %v633, %v636
    %640 = vrot.lane.b32.xlu0 %v634, 64
    %v641 = vpop.permute.xlu0 %640
    %v643 = vmul.f32 %v633, %v641
    %645 = vrot.lane.b32.xlu0 %v643, 32
    %v646 = vpop.permute.xlu0 %645
    %v648 = vadd.f32 %v638, %v646
    %v649 = vtanh.pop %v648
    %651 = vrot.lane.b32.xlu0 %v649, 64
    %v652 = vpop.permute.xlu0 %651
    %v654 = vmul.f32 %v633, %v652
    %656 = vrot.lane.b32.xlu0 %v654, 32
    %v657 = vpop.permute.xlu0 %656
    %vm659 = vcmask 261126
    %660 = vst.msk [vmem:[#allocation8 - $0x6] sm:$0xc0] %vm659, %v657
    // Predicated region
    $region30: #{tpu_custom_call.1} parent=1 // pred_check
      _
    $region31: #{tpu_custom_call.1} parent=1 // pred_check_branch
      %662 = sbr.rel (0) target = $region33
    $region32: #{tpu_custom_call.1} parent=1 // pred_region
      %664 = vsyncadd [#allocation4], 0
      %s666 = sshll.u32 [#allocation8], 4
      %s667 = int_to_ptr.vmem [resolvable:$true] %s666
      %s668 = sshll.u32 %s4, 4
      %s669 = int_to_ptr.hbm [resolvable:$true] %s668
      %671 = dma.vmem_to_hbm [thread:$0]  %s667, 32, %s669, [#allocation4]
    $region33: #{tpu_custom_call.1} parent=1 // pred_fallthru
      _
    // Predicated region
    $region34: #{tpu_custom_call.1} parent=1 // pred_check
      _
    $region35: #{tpu_custom_call.1} parent=1 // pred_check_branch
      %673 = sbr.rel (0) target = $region37
    $region36: #{tpu_custom_call.1} parent=1 // pred_region
      %675 = dma.done [#allocation4], 32
    $region37: #{tpu_custom_call.1} parent=1 // pred_fallthru
      _
    %676 = vsyncpa [#allocation3], 1
    %677 = vsyncpa [#allocation6], 1
    %678 = vsyncpa [#allocation4], 1

</llo_original>
